<compile_context>
chip_gen: v7x
topology: tpu7x:2x2x1
jax: 0.10.0
libtpu: 0.0.40
codegen_flags: <defaults>
</compile_context>

<pallas_src>
import functools

import jax
import jax.numpy as jnp
from jax.experimental import pallas as pl
from jax.experimental.pallas import tpu as pltpu

_LANES = 128
_SUBLANES = 8
_MIN_BLOCK = _LANES * _SUBLANES   # 1024 boxes = one minimal (8,128) f32 tile


def _giou_partial_kernel(n_ref, data_ref, out_ref, *, transform_type, eps,
                         block_n):
    tr = block_n // _LANES                    # sublane rows in this tile

    # Anchor coordinate planes, each (tr, 128).
    ax1 = data_ref[0, 0]
    ay1 = data_ref[0, 1]
    ax2 = data_ref[0, 2]
    ay2 = data_ref[0, 3]

    widths = ax2 - ax1
    heights = ay2 - ay1
    ctr_x = ax1 + 0.5 * widths
    ctr_y = ay1 + 0.5 * heights

    def decode(src):
        d0 = data_ref[src, 0]
        d1 = data_ref[src, 1]
        d2 = data_ref[src, 2]
        d3 = data_ref[src, 3]
        if transform_type == 'linear':
            l = jnp.maximum(d0, 0.0) * widths
            t = jnp.maximum(d1, 0.0) * heights
            r = jnp.maximum(d2, 0.0) * widths
            b = jnp.maximum(d3, 0.0) * heights
            return ctr_x - l, ctr_y - t, ctr_x + r, ctr_y + b
        pcx = d0 * widths + ctr_x
        pcy = d1 * heights + ctr_y
        pw = jnp.exp(d2) * widths
        ph = jnp.exp(d3) * heights
        return (pcx - 0.5 * pw, pcy - 0.5 * ph,
                pcx + 0.5 * pw, pcy + 0.5 * ph)

    x1, y1, x2, y2 = decode(1)       # pred deltas
    x1g, y1g, x2g, y2g = decode(2)   # target deltas

    pred_area = (x2 - x1) * (y2 - y1)
    target_area = (x2g - x1g) * (y2g - y1g)

    w_inter = jnp.maximum(jnp.minimum(x2, x2g) - jnp.maximum(x1, x1g), 0.0)
    h_inter = jnp.maximum(jnp.minimum(y2, y2g) - jnp.maximum(y1, y1g), 0.0)
    area_inter = w_inter * h_inter

    area_enc = ((jnp.maximum(x2, x2g) - jnp.minimum(x1, x1g)) *
                (jnp.maximum(y2, y2g) - jnp.minimum(y1, y1g)))
    area_union = pred_area + target_area - area_inter

    # Divisions -> EUP approx reciprocal.
    iou = area_inter * pl.reciprocal(area_union + eps, approx=True)
    giou = iou - (area_enc - area_union) * pl.reciprocal(area_enc + eps,
                                                         approx=True)

    # In-kernel validity mask: global box index < n (scalar-prefetched).
    row = jax.lax.broadcasted_iota(jnp.int32, (tr, _LANES), 0)
    lane = jax.lax.broadcasted_iota(jnp.int32, (tr, _LANES), 1)
    idx = pl.program_id(0) * block_n + row * _LANES + lane
    mask = (idx < n_ref[0]).astype(jnp.float32)

    loss = (1.0 - giou) * mask                 # (tr, 128)

    # Fold the tile down to a single f32 vreg (8,128) of partial sums; the
    # cross-lane/sublane reduce happens once, outside the kernel.
    partial = loss[0:_SUBLANES]
    for g in range(1, tr // _SUBLANES):
        partial = partial + loss[g * _SUBLANES:(g + 1) * _SUBLANES]
    out_ref[0] = partial


def giou_loss(pred, target, anchor, *, transform_type=None, eps=1e-7,
              reduction='sum', block_n=32768):
    """GIoU loss. pred/target/anchor: [N, 4] float arrays."""
    n = pred.shape[0]

    # Effective tile: a multiple of 1024 boxes, but no larger than needed.
    block_n = max(_MIN_BLOCK, (block_n // _MIN_BLOCK) * _MIN_BLOCK)
    n_tight = pl.cdiv(n, _MIN_BLOCK) * _MIN_BLOCK
    block_n = min(block_n, n_tight)
    n_pad = pl.cdiv(n, block_n) * block_n
    num_tiles = n_pad // block_n
    tr = block_n // _LANES

    # Single stacked, sublane-dense input: (3, 4, N_pad//128, 128).
    data = jnp.stack([jnp.asarray(anchor, jnp.float32),
                      jnp.asarray(pred, jnp.float32),
                      jnp.asarray(target, jnp.float32)], axis=0)   # (3, N, 4)
    data = jnp.pad(data, ((0, 0), (0, n_pad - n), (0, 0)))
    data = jnp.transpose(data, (0, 2, 1)).reshape(
        3, 4, n_pad // _LANES, _LANES)

    kernel = functools.partial(_giou_partial_kernel,
                               transform_type=transform_type, eps=eps,
                               block_n=block_n)
    partials = pl.pallas_call(
        kernel,
        out_shape=jax.ShapeDtypeStruct((num_tiles, _SUBLANES, _LANES),
                                       jnp.float32),
        grid_spec=pltpu.PrefetchScalarGridSpec(
            num_scalar_prefetch=1,
            grid=(num_tiles,),
            in_specs=[pl.BlockSpec((3, 4, tr, _LANES),
                                   lambda i, n_s: (0, 0, i, 0))],
            out_specs=pl.BlockSpec((1, _SUBLANES, _LANES),
                                   lambda i, n_s: (i, 0, 0))),
        compiler_params=pltpu.CompilerParams(
            dimension_semantics=("parallel",)),
    )(jnp.array([n], jnp.int32), data)

    total = jnp.sum(partials)
    if reduction == 'mean':
        return total / n
    if reduction == 'sum':
        return total
    # TODO(synk): reduction='none' (per-box loss output) not wired up; the
    # reference module defaults to 'sum'.
    raise NotImplementedError("reduction='none' not implemented")


def _giou_loss_ref(pred, target, anchor, transform_type=None, eps=1e-7,
                   reduction='sum'):
    """Pure-JAX reference mirroring the PyTorch module."""
    a = jnp.asarray(anchor, jnp.float32)
    widths = a[:, 2:3] - a[:, 0:1]
    heights = a[:, 3:4] - a[:, 1:2]
    ctr_x = a[:, 0:1] + 0.5 * widths
    ctr_y = a[:, 1:2] + 0.5 * heights

    def inv(d):
        d = jnp.asarray(d, jnp.float32)
        if transform_type == 'linear':
            strides = jnp.concatenate([widths, heights, widths, heights], 1)
            d = jnp.maximum(d, 0.0) * strides
            l, t, r, b = jnp.split(d, 4, axis=1)
            return ctr_x - l, ctr_y - t, ctr_x + r, ctr_y + b
        dx, dy, dw, dh = jnp.split(d, 4, axis=1)
        pcx = dx * widths + ctr_x
        pcy = dy * heights + ctr_y
        pw = jnp.exp(dw) * widths
        ph = jnp.exp(dh) * heights
        return pcx - 0.5 * pw, pcy - 0.5 * ph, pcx + 0.5 * pw, pcy + 0.5 * ph

    x1, y1, x2, y2 = inv(pred)
    x1g, y1g, x2g, y2g = inv(target)
    pred_area = (x2 - x1) * (y2 - y1)
    target_area = (x2g - x1g) * (y2g - y1g)
    w_i = jnp.maximum(jnp.minimum(x2, x2g) - jnp.maximum(x1, x1g), 0.0)
    h_i = jnp.maximum(jnp.minimum(y2, y2g) - jnp.maximum(y1, y1g), 0.0)
    area_i = w_i * h_i
    area_enc = ((jnp.maximum(x2, x2g) - jnp.minimum(x1, x1g)) *
                (jnp.maximum(y2, y2g) - jnp.minimum(y1, y1g)))
    area_u = pred_area + target_area - area_i
    iou = area_i / (area_u + eps)
    giou = iou - (area_enc - area_u) / (area_enc + eps)
    loss = (1.0 - giou).flatten()
    if reduction == 'mean':
        return loss.mean()
    if reduction == 'sum':
        return loss.sum()
    return loss


if __name__ == "__main__":
    def make_inputs(n, ka, kb, kc, kd):
        base = jax.random.uniform(ka, (n, 2), jnp.float32, 0.0, 10.0)
        wh = jax.random.uniform(kb, (n, 2), jnp.float32, 1.0, 5.0)
        anchor = jnp.concatenate([base, base + wh], axis=1)        # [N, 4]
        pred = 0.1 * jax.random.normal(kc, (n, 4), jnp.float32)    # deltas
        target = 0.1 * jax.random.normal(kd, (n, 4), jnp.float32)  # deltas
        return pred, target, anchor

    k1, k2, k3, k4 = jax.random.split(jax.random.PRNGKey(0), 4)

    # Case 1: small N, exp transform, sum reduction (module defaults).
    pred, target, anchor = make_inputs(10, k1, k2, k3, k4)
    out = jax.block_until_ready(
        giou_loss(pred, target, anchor, transform_type=None,
                  eps=1e-7, reduction='sum'))
    ref = _giou_loss_ref(pred, target, anchor, None, 1e-7, 'sum')
    assert jnp.allclose(out, ref, rtol=5e-3, atol=1e-3), (out, ref)

    # Case 2: multi-tile grid (block_n=1024 -> 3 tiles), padded tail, mean.
    k5, k6, k7, k8 = jax.random.split(jax.random.PRNGKey(1), 4)
    pred2, target2, anchor2 = make_inputs(3000, k5, k6, k7, k8)
    out2 = jax.block_until_ready(
        giou_loss(pred2, target2, anchor2, transform_type=None,
                  eps=1e-7, reduction='mean', block_n=1024))
    ref2 = _giou_loss_ref(pred2, target2, anchor2, None, 1e-7, 'mean')
    assert jnp.allclose(out2, ref2, rtol=5e-3, atol=1e-3), (out2, ref2)

    # Case 3: linear transform, sum reduction.
    k9, k10 = jax.random.split(jax.random.PRNGKey(2), 2)
    pred3 = jax.random.uniform(k9, (200, 4), jnp.float32, 0.0, 2.0)
    target3 = jax.random.uniform(k10, (200, 4), jnp.float32, 0.0, 2.0)
    _, _, anchor3 = make_inputs(200, k1, k2, k3, k4)
    out3 = jax.block_until_ready(
        giou_loss(pred3, target3, anchor3, transform_type='linear',
                  eps=1e-7, reduction='sum'))
    ref3 = _giou_loss_ref(pred3, target3, anchor3, 'linear', 1e-7, 'sum')
    assert jnp.allclose(out3, ref3, rtol=5e-3, atol=1e-3), (out3, ref3)

    print("KERNEL_OK")
</pallas_src>

<mosaic_0001>
module attributes {stable_mosaic.version = 11 : i64} {
  func.func @_giou_partial_kernel(%arg0: i32, %arg1: memref<1xi32, #tpu.memory_space<smem>>, %arg2: memref<3x4x8x128xf32, #tpu.memory_space<vmem>>, %arg3: memref<1x8x128xf32, #tpu.memory_space<vmem>>) attributes {dimension_semantics = [#tpu.dimension_semantics<parallel>], iteration_bounds = array<i64: 1>, scalar_prefetch = 1 : i64, scratch_operands = 0 : i64, tpu.core_type = #tpu.core_type<tc>, window_params = [{transform_indices = @transform_0, window_bounds = array<i64: 3, 4, 8, 128>}, {transform_indices = @transform_1, window_bounds = array<i64: 1, 8, 128>}]} {
    %c0 = arith.constant 0 : index
    %c0_0 = arith.constant 0 : index
    %c0_1 = arith.constant 0 : index
    %c0_2 = arith.constant 0 : index
    %0 = vector.load %arg2[%c0, %c0_0, %c0_1, %c0_2] : memref<3x4x8x128xf32, #tpu.memory_space<vmem>>, vector<1x1x8x128xf32>
    %1 = vector.shape_cast %0 : vector<1x1x8x128xf32> to vector<8x128xf32>
    %c0_3 = arith.constant 0 : index
    %c1 = arith.constant 1 : index
    %c0_4 = arith.constant 0 : index
    %c0_5 = arith.constant 0 : index
    %2 = vector.load %arg2[%c0_3, %c1, %c0_4, %c0_5] : memref<3x4x8x128xf32, #tpu.memory_space<vmem>>, vector<1x1x8x128xf32>
    %3 = vector.shape_cast %2 : vector<1x1x8x128xf32> to vector<8x128xf32>
    %c0_6 = arith.constant 0 : index
    %c2 = arith.constant 2 : index
    %c0_7 = arith.constant 0 : index
    %c0_8 = arith.constant 0 : index
    %4 = vector.load %arg2[%c0_6, %c2, %c0_7, %c0_8] : memref<3x4x8x128xf32, #tpu.memory_space<vmem>>, vector<1x1x8x128xf32>
    %5 = vector.shape_cast %4 : vector<1x1x8x128xf32> to vector<8x128xf32>
    %c0_9 = arith.constant 0 : index
    %c3 = arith.constant 3 : index
    %c0_10 = arith.constant 0 : index
    %c0_11 = arith.constant 0 : index
    %6 = vector.load %arg2[%c0_9, %c3, %c0_10, %c0_11] : memref<3x4x8x128xf32, #tpu.memory_space<vmem>>, vector<1x1x8x128xf32>
    %7 = vector.shape_cast %6 : vector<1x1x8x128xf32> to vector<8x128xf32>
    %8 = arith.subf %5, %1 : vector<8x128xf32>
    %9 = arith.subf %7, %3 : vector<8x128xf32>
    %cst = arith.constant 5.000000e-01 : f32
    %10 = vector.broadcast %cst : f32 to vector<8x128xf32>
    %11 = arith.mulf %10, %8 : vector<8x128xf32>
    %12 = arith.addf %1, %11 : vector<8x128xf32>
    %cst_12 = arith.constant 5.000000e-01 : f32
    %13 = vector.broadcast %cst_12 : f32 to vector<8x128xf32>
    %14 = arith.mulf %13, %9 : vector<8x128xf32>
    %15 = arith.addf %3, %14 : vector<8x128xf32>
    %c1_13 = arith.constant 1 : index
    %c0_14 = arith.constant 0 : index
    %c0_15 = arith.constant 0 : index
    %c0_16 = arith.constant 0 : index
    %16 = vector.load %arg2[%c1_13, %c0_14, %c0_15, %c0_16] : memref<3x4x8x128xf32, #tpu.memory_space<vmem>>, vector<1x1x8x128xf32>
    %17 = vector.shape_cast %16 : vector<1x1x8x128xf32> to vector<8x128xf32>
    %c1_17 = arith.constant 1 : index
    %c1_18 = arith.constant 1 : index
    %c0_19 = arith.constant 0 : index
    %c0_20 = arith.constant 0 : index
    %18 = vector.load %arg2[%c1_17, %c1_18, %c0_19, %c0_20] : memref<3x4x8x128xf32, #tpu.memory_space<vmem>>, vector<1x1x8x128xf32>
    %19 = vector.shape_cast %18 : vector<1x1x8x128xf32> to vector<8x128xf32>
    %c1_21 = arith.constant 1 : index
    %c2_22 = arith.constant 2 : index
    %c0_23 = arith.constant 0 : index
    %c0_24 = arith.constant 0 : index
    %20 = vector.load %arg2[%c1_21, %c2_22, %c0_23, %c0_24] : memref<3x4x8x128xf32, #tpu.memory_space<vmem>>, vector<1x1x8x128xf32>
    %21 = vector.shape_cast %20 : vector<1x1x8x128xf32> to vector<8x128xf32>
    %c1_25 = arith.constant 1 : index
    %c3_26 = arith.constant 3 : index
    %c0_27 = arith.constant 0 : index
    %c0_28 = arith.constant 0 : index
    %22 = vector.load %arg2[%c1_25, %c3_26, %c0_27, %c0_28] : memref<3x4x8x128xf32, #tpu.memory_space<vmem>>, vector<1x1x8x128xf32>
    %23 = vector.shape_cast %22 : vector<1x1x8x128xf32> to vector<8x128xf32>
    %24 = arith.mulf %17, %8 : vector<8x128xf32>
    %25 = arith.addf %24, %12 : vector<8x128xf32>
    %26 = arith.mulf %19, %9 : vector<8x128xf32>
    %27 = arith.addf %26, %15 : vector<8x128xf32>
    %28 = math.exp %21 : vector<8x128xf32>
    %29 = arith.mulf %28, %8 : vector<8x128xf32>
    %30 = math.exp %23 : vector<8x128xf32>
    %31 = arith.mulf %30, %9 : vector<8x128xf32>
    %cst_29 = arith.constant 5.000000e-01 : f32
    %32 = vector.broadcast %cst_29 : f32 to vector<8x128xf32>
    %33 = arith.mulf %32, %29 : vector<8x128xf32>
    %34 = arith.subf %25, %33 : vector<8x128xf32>
    %cst_30 = arith.constant 5.000000e-01 : f32
    %35 = vector.broadcast %cst_30 : f32 to vector<8x128xf32>
    %36 = arith.mulf %35, %31 : vector<8x128xf32>
    %37 = arith.subf %27, %36 : vector<8x128xf32>
    %cst_31 = arith.constant 5.000000e-01 : f32
    %38 = vector.broadcast %cst_31 : f32 to vector<8x128xf32>
    %39 = arith.mulf %38, %29 : vector<8x128xf32>
    %40 = arith.addf %25, %39 : vector<8x128xf32>
    %cst_32 = arith.constant 5.000000e-01 : f32
    %41 = vector.broadcast %cst_32 : f32 to vector<8x128xf32>
    %42 = arith.mulf %41, %31 : vector<8x128xf32>
    %43 = arith.addf %27, %42 : vector<8x128xf32>
    %c2_33 = arith.constant 2 : index
    %c0_34 = arith.constant 0 : index
    %c0_35 = arith.constant 0 : index
    %c0_36 = arith.constant 0 : index
    %44 = vector.load %arg2[%c2_33, %c0_34, %c0_35, %c0_36] : memref<3x4x8x128xf32, #tpu.memory_space<vmem>>, vector<1x1x8x128xf32>
    %45 = vector.shape_cast %44 : vector<1x1x8x128xf32> to vector<8x128xf32>
    %c2_37 = arith.constant 2 : index
    %c1_38 = arith.constant 1 : index
    %c0_39 = arith.constant 0 : index
    %c0_40 = arith.constant 0 : index
    %46 = vector.load %arg2[%c2_37, %c1_38, %c0_39, %c0_40] : memref<3x4x8x128xf32, #tpu.memory_space<vmem>>, vector<1x1x8x128xf32>
    %47 = vector.shape_cast %46 : vector<1x1x8x128xf32> to vector<8x128xf32>
    %c2_41 = arith.constant 2 : index
    %c2_42 = arith.constant 2 : index
    %c0_43 = arith.constant 0 : index
    %c0_44 = arith.constant 0 : index
    %48 = vector.load %arg2[%c2_41, %c2_42, %c0_43, %c0_44] : memref<3x4x8x128xf32, #tpu.memory_space<vmem>>, vector<1x1x8x128xf32>
    %49 = vector.shape_cast %48 : vector<1x1x8x128xf32> to vector<8x128xf32>
    %c2_45 = arith.constant 2 : index
    %c3_46 = arith.constant 3 : index
    %c0_47 = arith.constant 0 : index
    %c0_48 = arith.constant 0 : index
    %50 = vector.load %arg2[%c2_45, %c3_46, %c0_47, %c0_48] : memref<3x4x8x128xf32, #tpu.memory_space<vmem>>, vector<1x1x8x128xf32>
    %51 = vector.shape_cast %50 : vector<1x1x8x128xf32> to vector<8x128xf32>
    %52 = arith.mulf %45, %8 : vector<8x128xf32>
    %53 = arith.addf %52, %12 : vector<8x128xf32>
    %54 = arith.mulf %47, %9 : vector<8x128xf32>
    %55 = arith.addf %54, %15 : vector<8x128xf32>
    %56 = math.exp %49 : vector<8x128xf32>
    %57 = arith.mulf %56, %8 : vector<8x128xf32>
    %58 = math.exp %51 : vector<8x128xf32>
    %59 = arith.mulf %58, %9 : vector<8x128xf32>
    %cst_49 = arith.constant 5.000000e-01 : f32
    %60 = vector.broadcast %cst_49 : f32 to vector<8x128xf32>
    %61 = arith.mulf %60, %57 : vector<8x128xf32>
    %62 = arith.subf %53, %61 : vector<8x128xf32>
    %cst_50 = arith.constant 5.000000e-01 : f32
    %63 = vector.broadcast %cst_50 : f32 to vector<8x128xf32>
    %64 = arith.mulf %63, %59 : vector<8x128xf32>
    %65 = arith.subf %55, %64 : vector<8x128xf32>
    %cst_51 = arith.constant 5.000000e-01 : f32
    %66 = vector.broadcast %cst_51 : f32 to vector<8x128xf32>
    %67 = arith.mulf %66, %57 : vector<8x128xf32>
    %68 = arith.addf %53, %67 : vector<8x128xf32>
    %cst_52 = arith.constant 5.000000e-01 : f32
    %69 = vector.broadcast %cst_52 : f32 to vector<8x128xf32>
    %70 = arith.mulf %69, %59 : vector<8x128xf32>
    %71 = arith.addf %55, %70 : vector<8x128xf32>
    %72 = arith.subf %40, %34 : vector<8x128xf32>
    %73 = arith.subf %43, %37 : vector<8x128xf32>
    %74 = arith.mulf %72, %73 : vector<8x128xf32>
    %75 = arith.subf %68, %62 : vector<8x128xf32>
    %76 = arith.subf %71, %65 : vector<8x128xf32>
    %77 = arith.mulf %75, %76 : vector<8x128xf32>
    %78 = arith.minimumf %40, %68 : vector<8x128xf32>
    %79 = arith.maximumf %34, %62 : vector<8x128xf32>
    %80 = arith.subf %78, %79 : vector<8x128xf32>
    %cst_53 = arith.constant 0.000000e+00 : f32
    %81 = vector.broadcast %cst_53 : f32 to vector<8x128xf32>
    %82 = arith.maximumf %80, %81 : vector<8x128xf32>
    %83 = arith.minimumf %43, %71 : vector<8x128xf32>
    %84 = arith.maximumf %37, %65 : vector<8x128xf32>
    %85 = arith.subf %83, %84 : vector<8x128xf32>
    %cst_54 = arith.constant 0.000000e+00 : f32
    %86 = vector.broadcast %cst_54 : f32 to vector<8x128xf32>
    %87 = arith.maximumf %85, %86 : vector<8x128xf32>
    %88 = arith.mulf %82, %87 : vector<8x128xf32>
    %89 = arith.maximumf %40, %68 : vector<8x128xf32>
    %90 = arith.minimumf %34, %62 : vector<8x128xf32>
    %91 = arith.subf %89, %90 : vector<8x128xf32>
    %92 = arith.maximumf %43, %71 : vector<8x128xf32>
    %93 = arith.minimumf %37, %65 : vector<8x128xf32>
    %94 = arith.subf %92, %93 : vector<8x128xf32>
    %95 = arith.mulf %91, %94 : vector<8x128xf32>
    %96 = arith.addf %74, %77 : vector<8x128xf32>
    %97 = arith.subf %96, %88 : vector<8x128xf32>
    %cst_55 = arith.constant 1.000000e-07 : f32
    %98 = vector.broadcast %cst_55 : f32 to vector<8x128xf32>
    %99 = arith.addf %97, %98 : vector<8x128xf32>
    %100 = tpu.reciprocal %99 {approx = true} : vector<8x128xf32> -> vector<8x128xf32>
    %101 = arith.mulf %88, %100 : vector<8x128xf32>
    %102 = arith.subf %95, %97 : vector<8x128xf32>
    %cst_56 = arith.constant 1.000000e-07 : f32
    %103 = vector.broadcast %cst_56 : f32 to vector<8x128xf32>
    %104 = arith.addf %95, %103 : vector<8x128xf32>
    %105 = tpu.reciprocal %104 {approx = true} : vector<8x128xf32> -> vector<8x128xf32>
    %106 = arith.mulf %102, %105 : vector<8x128xf32>
    %107 = arith.subf %101, %106 : vector<8x128xf32>
    %108 = tpu.iota {dimensions = array<i32: 0>} : vector<8x128xi32>
    %109 = tpu.iota {dimensions = array<i32: 1>} : vector<8x128xi32>
    %c1024_i32 = arith.constant 1024 : i32
    %110 = arith.muli %arg0, %c1024_i32 : i32
    %c128_i32 = arith.constant 128 : i32
    %111 = vector.broadcast %c128_i32 : i32 to vector<8x128xi32>
    %112 = arith.muli %108, %111 : vector<8x128xi32>
    %113 = vector.broadcast %110 : i32 to vector<8x128xi32>
    %114 = arith.addi %113, %112 : vector<8x128xi32>
    %115 = arith.addi %114, %109 : vector<8x128xi32>
    %c0_57 = arith.constant 0 : index
    %116 = memref.load %arg1[%c0_57] : memref<1xi32, #tpu.memory_space<smem>>
    %117 = vector.broadcast %116 : i32 to vector<8x128xi32>
    %118 = arith.cmpi slt, %115, %117 : vector<8x128xi32>
    %119 = arith.extui %118 : vector<8x128xi1> to vector<8x128xi32>
    %120 = arith.sitofp %119 : vector<8x128xi32> to vector<8x128xf32>
    %cst_58 = arith.constant 1.000000e+00 : f32
    %121 = vector.broadcast %cst_58 : f32 to vector<8x128xf32>
    %122 = arith.subf %121, %107 : vector<8x128xf32>
    %123 = arith.mulf %122, %120 : vector<8x128xf32>
    %c0_59 = arith.constant 0 : index
    %c0_60 = arith.constant 0 : index
    %c0_61 = arith.constant 0 : index
    %124 = vector.load %arg3[%c0_59, %c0_60, %c0_61] : memref<1x8x128xf32, #tpu.memory_space<vmem>>, vector<1x8x128xf32>
    %125 = vector.shape_cast %124 : vector<1x8x128xf32> to vector<8x128xf32>
    %126 = vector.shape_cast %123 : vector<8x128xf32> to vector<1x8x128xf32>
    tpu.vector_store %arg3[%c0_59, %c0_60, %c0_61], %126 {strides = array<i32>} : memref<1x8x128xf32, #tpu.memory_space<vmem>>, vector<1x8x128xf32>,
    return
  }
  func.func @transform_0(%arg0: i32, %arg1: memref<1xi32, #tpu.memory_space<smem>>) -> (i32, i32, i32, i32) {
    %c0_i32 = arith.constant 0 : i32
    %c0_i32_0 = arith.constant 0 : i32
    %c0_i32_1 = arith.constant 0 : i32
    %c0_i32_2 = arith.constant 0 : i32
    return %c0_i32, %c0_i32_0, %arg0, %c0_i32_1 : i32, i32, i32, i32
  }
  func.func @transform_1(%arg0: i32, %arg1: memref<1xi32, #tpu.memory_space<smem>>) -> (i32, i32, i32) {
    %c0_i32 = arith.constant 0 : i32
    %c0_i32_0 = arith.constant 0 : i32
    %c0_i32_1 = arith.constant 0 : i32
    return %arg0, %c0_i32, %c0_i32_0 : i32, i32, i32
  }
}

</mosaic_0001>

<llo_original>
// kernel: tpu_custom_call.1
$region0: #{tpu_custom_call.1}
  #allocation0 [shape = 'u32[]', space=smem, size = 0x4, offset = 0x4, fixed_abs, tag = 'smem constant byte address 0x4 - core index']
  #allocation1 [shape = 'u32[144,128]{1,0:T(1,128)}', space=vmem, size = 0x12000, scoped, tag = 'internal scratch']
  #allocation2 [shape = 's32[1]{0}', space=sflag, size = 0x4, scoped, tag = 'scoped memory for tpu_custom_call.1']
  #allocation3 [shape = 's32[1]{0:T(128)S(6)}', space=smem, size = 0x200, scoped, tag = 'prefetched SMEM operand 0']
  %s0 = inlined_call_operand.<no memory space> [shape: s32[1], index: 0, kind: input, shape index: {}]
  %s1 = inlined_call_operand.hbm [shape: f32[3,4,8,128], index: 1, kind: input, shape index: {}]
  %s2 = inlined_call_operand.hbm [shape: f32[1,8,128], index: 2, kind: output, shape index: {}]
  %s3 = sld [smem:[#allocation0]]
  $region18: #{tpu_custom_call.1} parent=0
    _
  %s5 = ssub.s32 1, %s3
  %s6 = scalar_select 0, %s5, %s3
  %7 = sst [smem:[#allocation3]] %s0
  $region1: #{tpu_custom_call.1} parent=0
    #allocation4 [shape = 'u8[49152]{0}', space=vmem, size = 0xc000, scoped, tag = 'input window, operand 1, single buffered']
    #allocation5 [shape = 's32[1]{0}', space=sflag, size = 0x4, scoped, tag = 'scoped memory for tpu_custom_call.1']
    #allocation6 [shape = 's32[1]{0}', space=sflag, size = 0x4, scoped, tag = 'scoped memory for tpu_custom_call.1']
    #allocation7 [shape = 'u8[4096]{0}', space=vmem, size = 0x1000, scoped, tag = 'output window, operand 0, single buffered']
    %8 = vsyncpa [#allocation5], 0
    %9 = vsyncpa [#allocation6], 0
    // Predicated region
    $region2: #{tpu_custom_call.1} parent=1 // pred_check
      _
    $region3: #{tpu_custom_call.1} parent=1 // pred_check_branch
      %11 = sbr.rel (0) target = $region5
    $region4: #{tpu_custom_call.1} parent=1 // pred_region
      %s13 = ssub.s32 1536, 1536
      %14 = vsyncadd [#allocation5], %s13
      %s15 = sshll.u32 [#allocation4], 4
      %s16 = int_to_ptr.vmem [resolvable:$true] %s15
      %21 = dma.hbm_to_vmem [thread:$0]  %s1, 1536, %s16, [#allocation5], 128, 128, 8
    $region5: #{tpu_custom_call.1} parent=1 // pred_fallthru
      _
    // Predicated region
    $region6: #{tpu_custom_call.1} parent=1 // pred_check
      _
    $region7: #{tpu_custom_call.1} parent=1 // pred_check_branch
      %23 = sbr.rel (0) target = $region9
    $region8: #{tpu_custom_call.1} parent=1 // pred_region
      %24 = dma.done [#allocation5], 1536
    $region9: #{tpu_custom_call.1} parent=1 // pred_fallthru
      _
    %v25 = vld [vmem:[#allocation4] sm:$0xff]
    %s26 = scalar_lea.vmem [#allocation4], 8
    %v27 = vld [vmem:[%s26] sm:$0xff]
    %s28 = scalar_lea.vmem [#allocation4], 16
    %v29 = vld [vmem:[%s28] sm:$0xff]
    %s30 = scalar_lea.vmem [#allocation4], 24
    %v31 = vld [vmem:[%s30] sm:$0xff]
    %v32 = vsub.f32 %v29, %v25
    %v33 = vsub.f32 %v31, %v27
    %v34 = vmul.f32 %v32, 0.5
    %v35 = vadd.f32 %v25, %v34
    %v36 = vmul.f32 %v33, 0.5
    %v37 = vadd.f32 %v27, %v36
    %s38 = scalar_lea.vmem [#allocation4], 32
    %v39 = vld [vmem:[%s38] sm:$0xff]
    %s40 = scalar_lea.vmem [#allocation4], 40
    %v41 = vld [vmem:[%s40] sm:$0xff]
    %s42 = scalar_lea.vmem [#allocation4], 48
    %v43 = vld [vmem:[%s42] sm:$0xff]
    %s44 = scalar_lea.vmem [#allocation4], 56
    %v45 = vld [vmem:[%s44] sm:$0xff]
    %v46 = vmul.f32 %v39, %v32
    %v47 = vadd.f32 %v46, %v35
    %v48 = vmul.f32 %v41, %v33
    %v49 = vadd.f32 %v48, %v37
    %v50 = vmul.f32 %v43, 1.442695
    %v51 = vpow.pop %v50
    %v52 = vmul.f32 %v51, %v32
    %v53 = vmul.f32 %v45, 1.442695
    %v54 = vpow.pop %v53
    %v55 = vmul.f32 %v54, %v33
    %v56 = vmul.f32 %v52, 0.5
    %v57 = vsub.f32 %v47, %v56
    %v58 = vmul.f32 %v55, 0.5
    %v59 = vsub.f32 %v49, %v58
    %v60 = vadd.f32 %v47, %v56
    %v61 = vadd.f32 %v49, %v58
    %s62 = scalar_lea.vmem [#allocation4], 64
    %v63 = vld [vmem:[%s62] sm:$0xff]
    %s64 = scalar_lea.vmem [#allocation4], 72
    %v65 = vld [vmem:[%s64] sm:$0xff]
    %s66 = scalar_lea.vmem [#allocation4], 80
    %v67 = vld [vmem:[%s66] sm:$0xff]
    %s68 = scalar_lea.vmem [#allocation4], 88
    %v69 = vld [vmem:[%s68] sm:$0xff]
    %v70 = vmul.f32 %v63, %v32
    %v71 = vadd.f32 %v70, %v35
    %v72 = vmul.f32 %v65, %v33
    %v73 = vadd.f32 %v72, %v37
    %v74 = vmul.f32 %v67, 1.442695
    %v75 = vpow.pop %v74
    %v76 = vmul.f32 %v75, %v32
    %v77 = vmul.f32 %v69, 1.442695
    %v78 = vpow.pop %v77
    %v79 = vmul.f32 %v78, %v33
    %v80 = vmul.f32 %v76, 0.5
    %v81 = vsub.f32 %v71, %v80
    %v82 = vmul.f32 %v79, 0.5
    %v83 = vsub.f32 %v73, %v82
    %v84 = vadd.f32 %v71, %v80
    %v85 = vadd.f32 %v73, %v82
    %v86 = vsub.f32 %v60, %v57
    %v87 = vsub.f32 %v61, %v59
    %v88 = vmul.f32 %v86, %v87
    %v89 = vsub.f32 %v84, %v81
    %v90 = vsub.f32 %v85, %v83
    %v91 = vmul.f32 %v89, %v90
    %v92 = vmin.f32 %v60, %v84
    %v93 = vmax.f32 %v57, %v81
    %v94 = vsub.f32 %v92, %v93
    %v95 = vmax.f32 %v94, 0.0
    %v96 = vmin.f32 %v61, %v85
    %v97 = vmax.f32 %v59, %v83
    %v98 = vsub.f32 %v96, %v97
    %v99 = vmax.f32 %v98, 0.0
    %v100 = vmul.f32 %v95, %v99
    %v101 = vmax.f32 %v60, %v84
    %v102 = vmin.f32 %v57, %v81
    %v103 = vsub.f32 %v101, %v102
    %v104 = vmax.f32 %v61, %v85
    %v105 = vmin.f32 %v59, %v83
    %v106 = vsub.f32 %v104, %v105
    %v107 = vmul.f32 %v103, %v106
    %v108 = vadd.f32 %v88, %v91
    %v109 = vsub.f32 %v108, %v100
    %v110 = vadd.f32 %v109, 1e-07
    %v111 = vrcp.pop %v110
    %v112 = vmul.f32 %v100, %v111
    %v113 = vsub.f32 %v107, %v109
    %v114 = vadd.f32 %v107, 1e-07
    %v115 = vrcp.pop %v114
    %v116 = vmul.f32 %v113, %v115
    %v117 = vsub.f32 %v112, %v116
    %v118 = vlaneseq
    %v119 = vshrl.u32 %v118, 7
    %v120 = vlaneseq
    %v121 = vand.u32 %v120, 127
    %s122 = smul.u32 0, 1024
    %v123 = vmul.u32 %v119, 128
    %v124 = vstv %s122
    %v125 = vadd.s32 %v124, %v123
    %v126 = vadd.s32 %v125, %v121
    %s127 = sld [smem:[#allocation3]]
    %v128 = vstv %s127
    %vm129 = vcmp.lt.s32.totalorder %v126, %v128
    %v130 = vsel %vm129, 1, 0
    %v131 = vcvt.s32.f32 %v130
    %v132 = vsub.f32 1.0, %v117
    %v133 = vmul.f32 %v132, %v131
    %134 = vst [vmem:[#allocation7] sm:$0xff] %v133
    // Predicated region
    $region10: #{tpu_custom_call.1} parent=1 // pred_check
      _
    $region11: #{tpu_custom_call.1} parent=1 // pred_check_branch
      %136 = sbr.rel (0) target = $region13
    $region12: #{tpu_custom_call.1} parent=1 // pred_region
      %s138 = ssub.s32 128, 128
      %139 = vsyncadd [#allocation6], %s138
      %s141 = sshll.u32 [#allocation7], 4
      %s142 = int_to_ptr.vmem [resolvable:$true] %s141
      %144 = dma.vmem_to_hbm [thread:$0]  %s142, 128, %s2, [#allocation6]
    $region13: #{tpu_custom_call.1} parent=1 // pred_fallthru
      _
    // Predicated region
    $region14: #{tpu_custom_call.1} parent=1 // pred_check
      _
    $region15: #{tpu_custom_call.1} parent=1 // pred_check_branch
      %146 = sbr.rel (0) target = $region17
    $region16: #{tpu_custom_call.1} parent=1 // pred_region
      %147 = dma.done [#allocation6], 128
    $region17: #{tpu_custom_call.1} parent=1 // pred_fallthru
      _
    %148 = vsyncpa [#allocation5], 1
    %149 = vsyncpa [#allocation6], 1

</llo_original>
